<compile_context>
chip_gen: v6e
topology: v6e:2x2x1
jax: 0.10.0
libtpu: 0.0.40
codegen_flags: <defaults>
</compile_context>

<pallas_src>
import functools

import jax
import jax.numpy as jnp
from jax.experimental import pallas as pl
from jax.experimental.pallas import tpu as pltpu


def _round_up(x, m):
    return ((x + m - 1) // m) * m


def _cdiv(a, b):
    return (a + b - 1) // b


def _vmem_budget_bytes():
    """~75% of physical VMEM (v7x: 64 MiB -> ~48 MiB, v5e/v6e: 128 MiB -> ~96 MiB)."""
    cap = 64 * 1024 * 1024
    try:
        cap = int(getattr(pltpu.get_tpu_info(), "vmem_capacity_bytes", cap))
    except Exception:
        pass
    return max(32 * 1024 * 1024, (cap * 3) // 4)


def _auto_block_rows(D, Lp, in_bytes, budget_bytes, max_rows=1024):
    """Largest batch tile (multiple of 8, <= max_rows) whose live VMEM fits the budget."""
    fixed = 2 * Lp * D * in_bytes            # centroids (worst case: double-buffered)
    fixed += 8 * Lp * 4 * 2                  # softplus(delta) block (sublane-padded)
    per_row = 2 * D * in_bytes               # pooled_output tile, double-buffered
    per_row += 2 * 128 * 4                   # labels column tile (lane-padded), double-buffered
    per_row += 4 * D * 4                     # f32 intermediates (x, c, diff) headroom
    per_row += 2 * Lp * max(in_bytes, 2)     # one-hot intermediate headroom
    avail = max(budget_bytes - fixed, 8 * per_row)
    return int(max(8, min(max_rows, (avail // per_row) // 8 * 8)))


def _boundary_loss_kernel(labels_ref, x_ref, cent_ref, dsp_ref, loss_ref, acc_ref,
                          *, inv_total_b):
    i = pl.program_id(1)                      # per-core reduction step
    tb = x_ref.shape[0]
    lp = cent_ref.shape[0]

    @pl.when(i == 0)
    def _():
        acc_ref[...] = jnp.zeros_like(acc_ref)

    # One-hot gather mask built on the VPU from the int32 label column --
    # no [B, L] one-hot is ever streamed from HBM.
    labels = labels_ref[...]                                           # (TB, 1) i32
    col = jax.lax.broadcasted_iota(jnp.int32, (tb, lp), 1)
    onehot = col == labels                                             # (TB, Lp) bool

    # centroids[labels]: MXU one-hot contraction in the input dtype (exact
    # selection, f32 accumulate).  Avoids the multi-pass f32 MXU path.
    c = jnp.dot(onehot.astype(cent_ref.dtype), cent_ref[...],
                preferred_element_type=jnp.float32)                    # (TB, D) f32
    # softplus(delta)[labels]: VPU select + lane reduce (XLU slot = MXU-slack filler).
    d = jnp.sum(jnp.where(onehot, dsp_ref[...], 0.0),
                axis=1, keepdims=True)                                 # (TB, 1) f32

    x = x_ref[...].astype(jnp.float32)
    diff = x - c
    euc = jnp.sqrt(jnp.sum(diff * diff, axis=1, keepdims=True))        # (TB, 1) f32

    # pos_loss + neg_loss == |euc - d|.  Padded rows carry the sentinel label
    # (no matching column -> c = d = 0) and zero features -> contribute exactly 0.
    acc_ref[...] += jnp.sum(jnp.abs(euc - d), axis=0, keepdims=True)

    @pl.when(i == pl.num_programs(1) - 1)
    def _():
        loss_ref[0] = acc_ref[...] * inv_total_b   # this core's partial of mean(|euc - d|)


def boundary_loss(pooled_output, centroids, labels, delta_param, *,
                  block_rows=None, input_dtype=jnp.bfloat16):
    """ADB BoundaryLoss forward.

    pooled_output: [B, D] float, centroids: [L, D] float, labels: [B] int,
    delta_param: [L] float  ->  (loss scalar f32, softplus(delta_param) [L] f32).

    input_dtype: dtype the dominant HBM streams (pooled_output, centroids) are
      cast to before the kernel.  Default bf16 halves the bandwidth-bound DMA
      (distances differ from f32 at ~3 decimal digits); pass jnp.float32 for
      full-precision streams.  In-kernel math is always f32.
    block_rows: batch tile override; default auto-sizes against the VMEM budget.
    """
    B, D = pooled_output.shape
    L = centroids.shape[0]

    Lp = _round_up(max(L, 1), 128)                 # lane-dense label dim
    in_bytes = jnp.dtype(input_dtype).itemsize
    budget = _vmem_budget_bytes()

    if block_rows is None:
        tb = _auto_block_rows(D, Lp, in_bytes, budget)
    else:
        tb = max(8, _round_up(block_rows, 8))
    tb = min(tb, _round_up(B, 8))
    if _round_up(B, 8) >= 16:                      # batch big enough to split across 2 TCs
        tb = min(tb, _round_up(_cdiv(B, 2), 8))

    num_tiles = _cdiv(B, tb)
    num_cores = 2 if num_tiles >= 2 else 1         # v7x megacore; harmless on 1-TC chips
    tiles_per_core = _cdiv(num_tiles, num_cores)
    Bp = num_cores * tiles_per_core * tb

    # softplus(delta): O(L) parameter transform, done once (and exactly) in XLA.
    delta_sp = jax.nn.softplus(delta_param.astype(jnp.float32))        # [L]
    dsp2d = jnp.pad(delta_sp.reshape(1, L), ((0, 0), (0, Lp - L)))

    x = pooled_output.astype(input_dtype)
    cent = centroids.astype(input_dtype)
    if Lp != L:
        cent = jnp.pad(cent, ((0, Lp - L), (0, 0)))
    labels2d = labels.astype(jnp.int32).reshape(B, 1)
    if Bp != B:
        x = jnp.pad(x, ((0, Bp - B), (0, 0)))
        # Sentinel label Lp matches no one-hot column -> padded rows add 0 loss.
        labels2d = jnp.pad(labels2d, ((0, Bp - B), (0, 0)), constant_values=Lp)

    kernel = functools.partial(_boundary_loss_kernel, inv_total_b=float(1.0 / B))

    def row_map(c, i):
        return (c * tiles_per_core + i, 0)

    def run(single_buffer_constants):
        if single_buffer_constants:
            # Grid-invariant blocks: one buffer is enough (constant index map
            # => fetched once), halving their VMEM footprint.
            const_spec = lambda shape: pl.BlockSpec(
                shape, lambda c, i: (0, 0), pipeline_mode=pl.Buffered(1))
        else:
            const_spec = lambda shape: pl.BlockSpec(shape, lambda c, i: (0, 0))
        return pl.pallas_call(
            kernel,
            grid=(num_cores, tiles_per_core),
            in_specs=[
                pl.BlockSpec((tb, 1), row_map),    # labels (batch-tiled column)
                pl.BlockSpec((tb, D), row_map),    # pooled_output (batch-tiled)
                const_spec((Lp, D)),               # centroids (resident)
                const_spec((1, Lp)),               # softplus(delta) (resident)
            ],
            out_specs=pl.BlockSpec((1, 1, 1), lambda c, i: (c, 0, 0)),
            out_shape=jax.ShapeDtypeStruct((num_cores, 1, 1), jnp.float32),
            scratch_shapes=[pltpu.VMEM((1, 1), jnp.float32)],
            compiler_params=pltpu.CompilerParams(
                dimension_semantics=("parallel", "arbitrary"),
                vmem_limit_bytes=int(budget),
            ),
        )(labels2d, x, cent, dsp2d)

    try:
        loss_parts = run(True)
    except Exception:  # pipeline_mode / pl.Buffered unavailable: default double-buffering
        loss_parts = run(False)

    return jnp.sum(loss_parts), delta_sp


def _reference(pooled_output, centroids, labels, delta_param):
    delta_sp = jax.nn.softplus(delta_param.astype(jnp.float32))
    c = centroids.astype(jnp.float32)[labels]
    d = delta_sp[labels]
    euc = jnp.linalg.norm(pooled_output.astype(jnp.float32) - c, axis=1)
    pos = jnp.where(euc > d, euc - d, 0.0)
    neg = jnp.where(euc < d, d - euc, 0.0)
    return pos.mean() + neg.mean(), delta_sp


if __name__ == "__main__":
    key = jax.random.PRNGKey(0)
    k1, k2, k3, k4 = jax.random.split(key, 4)

    # Shapes consistent with BoundaryLoss(num_labels=10, feat_dim=32) on a small batch.
    B, D, L = 8, 32, 10
    pooled = jax.random.normal(k1, (B, D), dtype=jnp.float32)
    centroids = jax.random.normal(k2, (L, D), dtype=jnp.float32)
    labels = jax.random.randint(k3, (B,), 0, L, dtype=jnp.int32)
    delta_param = jax.random.normal(k4, (L,), dtype=jnp.float32)   # nn.init.normal_

    # 1) f32 streams, single tile / single core.
    loss, dsp = boundary_loss(pooled, centroids, labels, delta_param,
                              input_dtype=jnp.float32)
    jax.block_until_ready((loss, dsp))
    ref_loss, ref_dsp = _reference(pooled, centroids, labels, delta_param)
    assert jnp.allclose(loss, ref_loss, rtol=1e-4, atol=1e-4), (loss, ref_loss)
    assert jnp.allclose(dsp, ref_dsp, rtol=1e-6, atol=1e-6)

    # 2) Ragged batch, multi-tile, 2-way core-parallel grid (f32 streams).
    B2 = 20
    pooled2 = jax.random.normal(k1, (B2, D), dtype=jnp.float32)
    labels2 = jax.random.randint(k3, (B2,), 0, L, dtype=jnp.int32)
    loss2, dsp2 = boundary_loss(pooled2, centroids, labels2, delta_param,
                                block_rows=8, input_dtype=jnp.float32)
    jax.block_until_ready((loss2, dsp2))
    ref_loss2, _ = _reference(pooled2, centroids, labels2, delta_param)
    assert jnp.allclose(loss2, ref_loss2, rtol=1e-4, atol=1e-4), (loss2, ref_loss2)

    # 3) Default bf16 streaming path with auto tile sizing (reference evaluated
    #    on the same bf16-rounded inputs).
    B3, D3, L3 = 200, 64, 20
    pooled3 = jax.random.normal(k1, (B3, D3), dtype=jnp.float32)
    cent3 = jax.random.normal(k2, (L3, D3), dtype=jnp.float32)
    labels3 = jax.random.randint(k3, (B3,), 0, L3, dtype=jnp.int32)
    delta3 = jax.random.normal(k4, (L3,), dtype=jnp.float32)
    loss3, dsp3 = boundary_loss(pooled3, cent3, labels3, delta3)
    jax.block_until_ready((loss3, dsp3))
    ref_loss3, ref_dsp3 = _reference(
        pooled3.astype(jnp.bfloat16).astype(jnp.float32),
        cent3.astype(jnp.bfloat16).astype(jnp.float32),
        labels3, delta3)
    assert jnp.allclose(loss3, ref_loss3, rtol=1e-3, atol=1e-3), (loss3, ref_loss3)
    assert jnp.allclose(dsp3, ref_dsp3, rtol=1e-6, atol=1e-6)

    print("KERNEL_OK")
</pallas_src>

<mosaic_0001>
module attributes {stable_mosaic.version = 11 : i64} {
  func.func @_boundary_loss_kernel(%arg0: i32, %arg1: i32, %arg2: memref<8x1xi32, #tpu.memory_space<vmem>>, %arg3: memref<8x32xf32, #tpu.memory_space<vmem>>, %arg4: memref<128x32xf32, #tpu.memory_space<vmem>>, %arg5: memref<1x128xf32, #tpu.memory_space<vmem>>, %arg6: memref<1x1x1xf32, #tpu.memory_space<vmem>>, %arg7: memref<1x1xf32, #tpu.memory_space<vmem>>) attributes {dimension_semantics = [#tpu.dimension_semantics<parallel>, #tpu.dimension_semantics<arbitrary>], iteration_bounds = array<i64: 1, 1>, scalar_prefetch = 0 : i64, scratch_operands = 1 : i64, tpu.core_type = #tpu.core_type<tc>, window_params = [{transform_indices = @transform_0, window_bounds = array<i64: 8, 1>}, {transform_indices = @transform_1, window_bounds = array<i64: 8, 32>}, {pipeline_mode = #tpu.pipeline_mode<synchronous>, transform_indices = @transform_2, window_bounds = array<i64: 128, 32>}, {pipeline_mode = #tpu.pipeline_mode<synchronous>, transform_indices = @transform_3, window_bounds = array<i64: 1, 128>}, {transform_indices = @transform_4, window_bounds = array<i64: 1, 1, 1>}]} {
    %c0_i32 = arith.constant 0 : i32
    %0 = arith.cmpi eq, %arg1, %c0_i32 : i32
    %1 = arith.extui %0 : i1 to i32
    %c0_i32_0 = arith.constant 0 : i32
    %2 = arith.cmpi ne, %1, %c0_i32_0 : i32
    scf.if %2 {
      %cst_18 = arith.constant 0.000000e+00 : f32
      %34 = vector.broadcast %cst_18 : f32 to vector<1x1xf32>
      %c0_19 = arith.constant 0 : index
      %c0_20 = arith.constant 0 : index
      %35 = vector.load %arg7[%c0_19, %c0_20] : memref<1x1xf32, #tpu.memory_space<vmem>>, vector<1x1xf32>
      tpu.vector_store %arg7[%c0_19, %c0_20], %34 {strides = array<i32>} : memref<1x1xf32, #tpu.memory_space<vmem>>, vector<1x1xf32>,
    } else {
    }
    %c0 = arith.constant 0 : index
    %c0_1 = arith.constant 0 : index
    %3 = vector.load %arg2[%c0, %c0_1] : memref<8x1xi32, #tpu.memory_space<vmem>>, vector<8x1xi32>
    %4 = tpu.iota {dimensions = array<i32: 1>} : vector<8x128xi32>
    %5 = vector.broadcast %3 : vector<8x1xi32> to vector<8x128xi32>
    %6 = arith.cmpi eq, %4, %5 : vector<8x128xi32>
    %7 = arith.extui %6 : vector<8x128xi1> to vector<8x128xi32>
    %8 = arith.sitofp %7 : vector<8x128xi32> to vector<8x128xf32>
    %c0_2 = arith.constant 0 : index
    %c0_3 = arith.constant 0 : index
    %9 = vector.load %arg4[%c0_2, %c0_3] : memref<128x32xf32, #tpu.memory_space<vmem>>, vector<128x32xf32>
    %cst = arith.constant dense<0.000000e+00> : vector<8x32xf32>
    %10 = tpu.matmul %8, %9, %cst {dimension_numbers = #tpu.dot_dimension_numbers<[1], [0], [0], [1], [0, 0, 1, 1], [], []>} : vector<8x128xf32>, vector<128x32xf32>, vector<8x32xf32> -> vector<8x32xf32>
    %c0_4 = arith.constant 0 : index
    %c0_5 = arith.constant 0 : index
    %11 = vector.load %arg5[%c0_4, %c0_5] : memref<1x128xf32, #tpu.memory_space<vmem>>, vector<1x128xf32>
    %cst_6 = arith.constant 0.000000e+00 : f32
    %12 = vector.shape_cast %11 : vector<1x128xf32> to vector<1x128xf32>
    %13 = vector.broadcast %12 : vector<1x128xf32> to vector<8x128xf32>
    %14 = vector.broadcast %cst_6 : f32 to vector<8x128xf32>
    %15 = arith.select %6, %13, %14 : vector<8x128xi1>, vector<8x128xf32>
    %cst_7 = arith.constant dense<0.000000e+00> : vector<8xf32>
    %16 = vector.multi_reduction <add>, %15, %cst_7 [1] : vector<8x128xf32> to vector<8xf32>
    %17 = vector.shape_cast %16 : vector<8xf32> to vector<8x1xf32>
    %c0_8 = arith.constant 0 : index
    %c0_9 = arith.constant 0 : index
    %18 = vector.load %arg3[%c0_8, %c0_9] : memref<8x32xf32, #tpu.memory_space<vmem>>, vector<8x32xf32>
    %19 = arith.subf %18, %10 : vector<8x32xf32>
    %20 = arith.mulf %19, %19 : vector<8x32xf32>
    %cst_10 = arith.constant dense<0.000000e+00> : vector<8xf32>
    %21 = vector.multi_reduction <add>, %20, %cst_10 [1] : vector<8x32xf32> to vector<8xf32>
    %22 = vector.shape_cast %21 : vector<8xf32> to vector<8x1xf32>
    %23 = math.sqrt %22 : vector<8x1xf32>
    %c0_11 = arith.constant 0 : index
    %c0_12 = arith.constant 0 : index
    %24 = vector.load %arg7[%c0_11, %c0_12] : memref<1x1xf32, #tpu.memory_space<vmem>>, vector<1x1xf32>
    %25 = arith.subf %23, %17 : vector<8x1xf32>
    %26 = math.absf %25 : vector<8x1xf32>
    %cst_13 = arith.constant dense<0.000000e+00> : vector<1xf32>
    %27 = vector.multi_reduction <add>, %26, %cst_13 [0] : vector<8x1xf32> to vector<1xf32>
    %28 = vector.shape_cast %27 : vector<1xf32> to vector<1x1xf32>
    %29 = arith.addf %24, %28 : vector<1x1xf32>
    %c0_14 = arith.constant 0 : index
    %c0_15 = arith.constant 0 : index
    %30 = vector.load %arg7[%c0_14, %c0_15] : memref<1x1xf32, #tpu.memory_space<vmem>>, vector<1x1xf32>
    tpu.vector_store %arg7[%c0_14, %c0_15], %29 {strides = array<i32>} : memref<1x1xf32, #tpu.memory_space<vmem>>, vector<1x1xf32>,
    %c0_i32_16 = arith.constant 0 : i32
    %31 = arith.cmpi eq, %arg1, %c0_i32_16 : i32
    %32 = arith.extui %31 : i1 to i32
    %c0_i32_17 = arith.constant 0 : i32
    %33 = arith.cmpi ne, %32, %c0_i32_17 : i32
    scf.if %33 {
      %c0_18 = arith.constant 0 : index
      %c0_19 = arith.constant 0 : index
      %34 = vector.load %arg7[%c0_18, %c0_19] : memref<1x1xf32, #tpu.memory_space<vmem>>, vector<1x1xf32>
      %cst_20 = arith.constant 1.250000e-01 : f32
      %35 = vector.broadcast %cst_20 : f32 to vector<1x1xf32>
      %36 = arith.mulf %34, %35 : vector<1x1xf32>
      %c0_21 = arith.constant 0 : index
      %c0_22 = arith.constant 0 : index
      %c0_23 = arith.constant 0 : index
      %37 = vector.load %arg6[%c0_21, %c0_22, %c0_23] : memref<1x1x1xf32, #tpu.memory_space<vmem>>, vector<1x1x1xf32>
      %38 = vector.shape_cast %37 : vector<1x1x1xf32> to vector<1x1xf32>
      %39 = vector.shape_cast %36 : vector<1x1xf32> to vector<1x1x1xf32>
      tpu.vector_store %arg6[%c0_21, %c0_22, %c0_23], %39 {strides = array<i32>} : memref<1x1x1xf32, #tpu.memory_space<vmem>>, vector<1x1x1xf32>,
    } else {
    }
    return
  }
  func.func @transform_0(%arg0: i32, %arg1: i32) -> (i32, i32) {
    %c1_i32 = arith.constant 1 : i32
    %0 = arith.muli %arg0, %c1_i32 : i32
    %1 = arith.addi %0, %arg1 : i32
    %c0_i32 = arith.constant 0 : i32
    %c0_i32_0 = arith.constant 0 : i32
    return %1, %c0_i32 : i32, i32
  }
  func.func @transform_1(%arg0: i32, %arg1: i32) -> (i32, i32) {
    %c1_i32 = arith.constant 1 : i32
    %0 = arith.muli %arg0, %c1_i32 : i32
    %1 = arith.addi %0, %arg1 : i32
    %c0_i32 = arith.constant 0 : i32
    %c0_i32_0 = arith.constant 0 : i32
    return %1, %c0_i32 : i32, i32
  }
  func.func @transform_2(%arg0: i32, %arg1: i32) -> (i32, i32) {
    %c0_i32 = arith.constant 0 : i32
    %c0_i32_0 = arith.constant 0 : i32
    %c0_i32_1 = arith.constant 0 : i32
    return %c0_i32, %c0_i32_0 : i32, i32
  }
  func.func @transform_3(%arg0: i32, %arg1: i32) -> (i32, i32) {
    %c0_i32 = arith.constant 0 : i32
    %c0_i32_0 = arith.constant 0 : i32
    %c0_i32_1 = arith.constant 0 : i32
    return %c0_i32, %c0_i32_0 : i32, i32
  }
  func.func @transform_4(%arg0: i32, %arg1: i32) -> (i32, i32, i32) {
    %c0_i32 = arith.constant 0 : i32
    %c0_i32_0 = arith.constant 0 : i32
    %c0_i32_1 = arith.constant 0 : i32
    return %arg0, %c0_i32, %c0_i32_0 : i32, i32, i32
  }
}

module attributes {stable_mosaic.version = 11 : i64} {
  func.func @_boundary_loss_kernel(%arg0: i32, %arg1: i32, %arg2: memref<8x1xi32, #tpu.memory_space<vmem>>, %arg3: memref<8x32xf32, #tpu.memory_space<vmem>>, %arg4: memref<128x32xf32, #tpu.memory_space<vmem>>, %arg5: memref<1x128xf32, #tpu.memory_space<vmem>>, %arg6: memref<1x1x1xf32, #tpu.memory_space<vmem>>, %arg7: memref<1x1xf32, #tpu.memory_space<vmem>>) attributes {dimension_semantics = [#tpu.dimension_semantics<parallel>, #tpu.dimension_semantics<arbitrary>], iteration_bounds = array<i64: 1, 1>, scalar_prefetch = 0 : i64, scratch_operands = 1 : i64, tpu.core_type = #tpu.core_type<tc>, window_params = [{transform_indices = @transform_0, window_bounds = array<i64: 8, 1>}, {transform_indices = @transform_1, window_bounds = array<i64: 8, 32>}, {pipeline_mode = #tpu.pipeline_mode<synchronous>, transform_indices = @transform_2, window_bounds = array<i64: 128, 32>}, {pipeline_mode = #tpu.pipeline_mode<synchronous>, transform_indices = @transform_3, window_bounds = array<i64: 1, 128>}, {transform_indices = @transform_4, window_bounds = array<i64: 1, 1, 1>}]} {
    %c0_i32 = arith.constant 0 : i32
    %0 = arith.cmpi eq, %arg1, %c0_i32 : i32
    %1 = arith.extui %0 : i1 to i32
    %c0_i32_0 = arith.constant 0 : i32
    %2 = arith.cmpi ne, %1, %c0_i32_0 : i32
    scf.if %2 {
      %cst_18 = arith.constant 0.000000e+00 : f32
      %34 = vector.broadcast %cst_18 : f32 to vector<1x1xf32>
      %c0_19 = arith.constant 0 : index
      %c0_20 = arith.constant 0 : index
      %35 = vector.load %arg7[%c0_19, %c0_20] : memref<1x1xf32, #tpu.memory_space<vmem>>, vector<1x1xf32>
      tpu.vector_store %arg7[%c0_19, %c0_20], %34 {strides = array<i32>} : memref<1x1xf32, #tpu.memory_space<vmem>>, vector<1x1xf32>,
    } else {
    }
    %c0 = arith.constant 0 : index
    %c0_1 = arith.constant 0 : index
    %3 = vector.load %arg2[%c0, %c0_1] : memref<8x1xi32, #tpu.memory_space<vmem>>, vector<8x1xi32>
    %4 = tpu.iota {dimensions = array<i32: 1>} : vector<8x128xi32>
    %5 = vector.broadcast %3 : vector<8x1xi32> to vector<8x128xi32>
    %6 = arith.cmpi eq, %4, %5 : vector<8x128xi32>
    %7 = arith.extui %6 : vector<8x128xi1> to vector<8x128xi32>
    %8 = arith.sitofp %7 : vector<8x128xi32> to vector<8x128xf32>
    %c0_2 = arith.constant 0 : index
    %c0_3 = arith.constant 0 : index
    %9 = vector.load %arg4[%c0_2, %c0_3] : memref<128x32xf32, #tpu.memory_space<vmem>>, vector<128x32xf32>
    %cst = arith.constant dense<0.000000e+00> : vector<8x32xf32>
    %10 = tpu.matmul %8, %9, %cst {dimension_numbers = #tpu.dot_dimension_numbers<[1], [0], [0], [1], [0, 0, 1, 1], [], []>} : vector<8x128xf32>, vector<128x32xf32>, vector<8x32xf32> -> vector<8x32xf32>
    %c0_4 = arith.constant 0 : index
    %c0_5 = arith.constant 0 : index
    %11 = vector.load %arg5[%c0_4, %c0_5] : memref<1x128xf32, #tpu.memory_space<vmem>>, vector<1x128xf32>
    %cst_6 = arith.constant 0.000000e+00 : f32
    %12 = vector.shape_cast %11 : vector<1x128xf32> to vector<1x128xf32>
    %13 = vector.broadcast %12 : vector<1x128xf32> to vector<8x128xf32>
    %14 = vector.broadcast %cst_6 : f32 to vector<8x128xf32>
    %15 = arith.select %6, %13, %14 : vector<8x128xi1>, vector<8x128xf32>
    %cst_7 = arith.constant dense<0.000000e+00> : vector<8xf32>
    %16 = vector.multi_reduction <add>, %15, %cst_7 [1] : vector<8x128xf32> to vector<8xf32>
    %17 = vector.shape_cast %16 : vector<8xf32> to vector<8x1xf32>
    %c0_8 = arith.constant 0 : index
    %c0_9 = arith.constant 0 : index
    %18 = vector.load %arg3[%c0_8, %c0_9] : memref<8x32xf32, #tpu.memory_space<vmem>>, vector<8x32xf32>
    %19 = arith.subf %18, %10 : vector<8x32xf32>
    %20 = arith.mulf %19, %19 : vector<8x32xf32>
    %cst_10 = arith.constant dense<0.000000e+00> : vector<8xf32>
    %21 = vector.multi_reduction <add>, %20, %cst_10 [1] : vector<8x32xf32> to vector<8xf32>
    %22 = vector.shape_cast %21 : vector<8xf32> to vector<8x1xf32>
    %23 = math.sqrt %22 : vector<8x1xf32>
    %c0_11 = arith.constant 0 : index
    %c0_12 = arith.constant 0 : index
    %24 = vector.load %arg7[%c0_11, %c0_12] : memref<1x1xf32, #tpu.memory_space<vmem>>, vector<1x1xf32>
    %25 = arith.subf %23, %17 : vector<8x1xf32>
    %26 = math.absf %25 : vector<8x1xf32>
    %cst_13 = arith.constant dense<0.000000e+00> : vector<1xf32>
    %27 = vector.multi_reduction <add>, %26, %cst_13 [0] : vector<8x1xf32> to vector<1xf32>
    %28 = vector.shape_cast %27 : vector<1xf32> to vector<1x1xf32>
    %29 = arith.addf %24, %28 : vector<1x1xf32>
    %c0_14 = arith.constant 0 : index
    %c0_15 = arith.constant 0 : index
    %30 = vector.load %arg7[%c0_14, %c0_15] : memref<1x1xf32, #tpu.memory_space<vmem>>, vector<1x1xf32>
    tpu.vector_store %arg7[%c0_14, %c0_15], %29 {strides = array<i32>} : memref<1x1xf32, #tpu.memory_space<vmem>>, vector<1x1xf32>,
    %c0_i32_16 = arith.constant 0 : i32
    %31 = arith.cmpi eq, %arg1, %c0_i32_16 : i32
    %32 = arith.extui %31 : i1 to i32
    %c0_i32_17 = arith.constant 0 : i32
    %33 = arith.cmpi ne, %32, %c0_i32_17 : i32
    scf.if %33 {
      %c0_18 = arith.constant 0 : index
      %c0_19 = arith.constant 0 : index
      %34 = vector.load %arg7[%c0_18, %c0_19] : memref<1x1xf32, #tpu.memory_space<vmem>>, vector<1x1xf32>
      %cst_20 = arith.constant 1.250000e-01 : f32
      %35 = vector.broadcast %cst_20 : f32 to vector<1x1xf32>
      %36 = arith.mulf %34, %35 : vector<1x1xf32>
      %c0_21 = arith.constant 0 : index
      %c0_22 = arith.constant 0 : index
      %c0_23 = arith.constant 0 : index
      %37 = vector.load %arg6[%c0_21, %c0_22, %c0_23] : memref<1x1x1xf32, #tpu.memory_space<vmem>>, vector<1x1x1xf32>
      %38 = vector.shape_cast %37 : vector<1x1x1xf32> to vector<1x1xf32>
      %39 = vector.shape_cast %36 : vector<1x1xf32> to vector<1x1x1xf32>
      tpu.vector_store %arg6[%c0_21, %c0_22, %c0_23], %39 {strides = array<i32>} : memref<1x1x1xf32, #tpu.memory_space<vmem>>, vector<1x1x1xf32>,
    } else {
    }
    return
  }
  func.func @transform_0(%arg0: i32, %arg1: i32) -> (i32, i32) {
    %c1_i32 = arith.constant 1 : i32
    %0 = arith.muli %arg0, %c1_i32 : i32
    %1 = arith.addi %0, %arg1 : i32
    %c0_i32 = arith.constant 0 : i32
    %c0_i32_0 = arith.constant 0 : i32
    return %1, %c0_i32 : i32, i32
  }
  func.func @transform_1(%arg0: i32, %arg1: i32) -> (i32, i32) {
    %c1_i32 = arith.constant 1 : i32
    %0 = arith.muli %arg0, %c1_i32 : i32
    %1 = arith.addi %0, %arg1 : i32
    %c0_i32 = arith.constant 0 : i32
    %c0_i32_0 = arith.constant 0 : i32
    return %1, %c0_i32 : i32, i32
  }
  func.func @transform_2(%arg0: i32, %arg1: i32) -> (i32, i32) {
    %c0_i32 = arith.constant 0 : i32
    %c0_i32_0 = arith.constant 0 : i32
    %c0_i32_1 = arith.constant 0 : i32
    return %c0_i32, %c0_i32_0 : i32, i32
  }
  func.func @transform_3(%arg0: i32, %arg1: i32) -> (i32, i32) {
    %c0_i32 = arith.constant 0 : i32
    %c0_i32_0 = arith.constant 0 : i32
    %c0_i32_1 = arith.constant 0 : i32
    return %c0_i32, %c0_i32_0 : i32, i32
  }
  func.func @transform_4(%arg0: i32, %arg1: i32) -> (i32, i32, i32) {
    %c0_i32 = arith.constant 0 : i32
    %c0_i32_0 = arith.constant 0 : i32
    %c0_i32_1 = arith.constant 0 : i32
    return %arg0, %c0_i32, %c0_i32_0 : i32, i32, i32
  }
}

</mosaic_0001>

<llo_original>
// kernel: tpu_custom_call.1
$region0: #{tpu_custom_call.1}
  #allocation0 [shape = 'u32[]', space=smem, size = 0x4, offset = 0x4, fixed_abs, tag = 'smem constant byte address 0x4 - core index']
  #allocation1 [shape = 'u32[144,128]{1,0:T(1,128)}', space=vmem, size = 0x12000, scoped, tag = 'internal scratch']
  #allocation2 [shape = 'f32[1,1]{1,0:T(1,128)}', space=vmem, size = 0x200, scoped, tag = 'scratch operand']
  %s0 = inlined_call_operand.vmem [shape: s32[8,1], index: 0, kind: input, shape index: {}]
  %s1 = inlined_call_operand.vmem [shape: f32[8,32], index: 1, kind: input, shape index: {}]
  %s2 = inlined_call_operand.vmem [shape: f32[128,32], index: 2, kind: input, shape index: {}]
  %s3 = inlined_call_operand.vmem [shape: f32[1,128], index: 3, kind: input, shape index: {}]
  %s4 = inlined_call_operand.hbm [shape: f32[1,1,1], index: 4, kind: output, shape index: {}]
  %s5 = sld [smem:[#allocation0]]
  $region34: #{tpu_custom_call.1} parent=0
    _
  %s7 = ssub.s32 1, %s5
  %s8 = scalar_select 0, %s7, %s5
  $region1: #{tpu_custom_call.1} parent=0
    #allocation3 [shape = 'u8[512]{0}', space=vmem, size = 0x400, scoped, tag = 'output window, operand 0, single buffered']
    #allocation4 [shape = 's32[1]{0}', space=sflag, size = 0x4, scoped, tag = 'scoped memory for tpu_custom_call.1']
    %9 = vsyncpa [#allocation4], 0
    // Predicated region
    $region2: #{tpu_custom_call.1} parent=1 // pred_check
      _
    $region3: #{tpu_custom_call.1} parent=1 // pred_check_branch
      %11 = sbr.rel (0) target = $region5
    $region4: #{tpu_custom_call.1} parent=1 // pred_region
      %s12 = sadd.s32 0, 0
      %p13 = scmp.lt.s32.totalorder %s12, 0
      %s14 = scalar_select %p13, %s12, 0
      %s15 = smul.addr %s14, 8
      %s16 = scalar_lea.vmem %s0, %s15
      %s17 = sadd.s32 0, 0
    $region5: #{tpu_custom_call.1} parent=1 // pred_fallthru
      _
    // Predicated region
    $region6: #{tpu_custom_call.1} parent=1 // pred_check
      _
    $region7: #{tpu_custom_call.1} parent=1 // pred_check_branch
      %19 = sbr.rel (0) target = $region9
    $region8: #{tpu_custom_call.1} parent=1 // pred_region
      %s20 = sadd.s32 0, 0
      %p21 = scmp.lt.s32.totalorder %s20, 0
      %s22 = scalar_select %p21, %s20, 0
      %s23 = smul.addr %s22, 8
      %s24 = scalar_lea.vmem %s1, %s23
      %s25 = sadd.s32 0, 0
    $region9: #{tpu_custom_call.1} parent=1 // pred_fallthru
      _
    // Predicated region
    $region10: #{tpu_custom_call.1} parent=1 // pred_check
      _
    $region11: #{tpu_custom_call.1} parent=1 // pred_check_branch
      %27 = sbr.rel (0) target = $region13
    $region12: #{tpu_custom_call.1} parent=1 // pred_region
      _
    $region13: #{tpu_custom_call.1} parent=1 // pred_fallthru
      _
    // Predicated region
    $region14: #{tpu_custom_call.1} parent=1 // pred_check
      _
    $region15: #{tpu_custom_call.1} parent=1 // pred_check_branch
      %29 = sbr.rel (0) target = $region17
    $region16: #{tpu_custom_call.1} parent=1 // pred_region
      _
    $region17: #{tpu_custom_call.1} parent=1 // pred_fallthru
      _
    %s30 = sadd.s32 0, 0
    %p31 = scmp.lt.s32.totalorder %s30, 0
    %s32 = scalar_select %p31, %s30, 0
    %s33 = smul.addr %s32, 8
    %s34 = scalar_lea.vmem %s0, %s33
    %s35 = sadd.s32 0, 0
    %p36 = scmp.lt.s32.totalorder %s35, 0
    %s37 = scalar_select %p36, %s35, 0
    %s38 = smul.addr %s37, 8
    %s39 = scalar_lea.vmem %s1, %s38
    %s40 = sadd.s32 0, 0
    %p41 = scmp.lt.s32.totalorder %s40, 0
    %s42 = scalar_select %p41, %s40, 0
    %s43 = smul.addr %s42, 8
    %s44 = scalar_lea.vmem %s0, %s43
    %s45 = sadd.s32 0, 0
    %s46 = sadd.s32 0, 0
    %p47 = scmp.lt.s32.totalorder %s46, 0
    %s48 = scalar_select %p47, %s46, 0
    %s49 = smul.addr %s48, 8
    %s50 = scalar_lea.vmem %s1, %s49
    %s51 = sadd.s32 0, 0
    %p52 = scmp.eq.s32.totalorder 0, 0
    // Predicated region
    $region18: #{tpu_custom_call.1} parent=1 // pred_check
      %p53 = pneg %p52
    $region19: #{tpu_custom_call.1} parent=1 // pred_check_branch
      %55 = sbr.rel (%p53) target = $region21
    $region20: #{tpu_custom_call.1} parent=1 // pred_region
      %vm56 = vcmask 0
      %57 = vst.msk [vmem:[#allocation2] sm:$0x1] %vm56, 0.0
    $region21: #{tpu_custom_call.1} parent=1 // pred_fallthru
      _
    %v58 = vld [vmem:[%s44] sm:$0xff]
    %v59 = vlaneseq
    %v60 = vand.u32 %v59, 127
    %61 = vset.pattern.permute.xlu0 0
    %62 = vperm.xlu0 %61, %v58
    %v63 = vpop.permute.xlu0 %62
    %vm64 = vcmp.eq.s32.totalorder %v60, %v63
    %v65 = vsel %vm64, 1, 0
    %v66 = vcvt.s32.f32 %v65
    %v67 = vld [vmem:[%s2] sm:$0xff]
    %v68 = vld [vmem:[%s2 + $0x8] sm:$0xff]
    %v69 = vld [vmem:[%s2 + $0x10] sm:$0xff]
    %v70 = vld [vmem:[%s2 + $0x18] sm:$0xff]
    %v71 = vld [vmem:[%s2 + $0x20] sm:$0xff]
    %v72 = vld [vmem:[%s2 + $0x28] sm:$0xff]
    %v73 = vld [vmem:[%s2 + $0x30] sm:$0xff]
    %v74 = vld [vmem:[%s2 + $0x38] sm:$0xff]
    %v75 = vld [vmem:[%s2 + $0x40] sm:$0xff]
    %v76 = vld [vmem:[%s2 + $0x48] sm:$0xff]
    %v77 = vld [vmem:[%s2 + $0x50] sm:$0xff]
    %v78 = vld [vmem:[%s2 + $0x58] sm:$0xff]
    %v79 = vld [vmem:[%s2 + $0x60] sm:$0xff]
    %v80 = vld [vmem:[%s2 + $0x68] sm:$0xff]
    %v81 = vld [vmem:[%s2 + $0x70] sm:$0xff]
    %v82 = vld [vmem:[%s2 + $0x78] sm:$0xff]
    %83 = vmatprep.subr.mxu0 0.0
    %84 = vmatpush1.msra.mxu0 %v82
    %85 = vmatprep.subr.mxu0 0.0
    %86 = vmatpush1.msra.mxu0 %v81
    %87 = vmatprep.subr.mxu0 0.0
    %88 = vmatpush1.msra.mxu0 %v80
    %89 = vmatprep.subr.mxu0 0.0
    %90 = vmatpush1.msra.mxu0 %v79
    %91 = vmatprep.subr.mxu0 0.0
    %92 = vmatpush1.msra.mxu0 %v78
    %93 = vmatprep.subr.mxu0 0.0
    %94 = vmatpush1.msra.mxu0 %v77
    %95 = vmatprep.subr.mxu0 0.0
    %96 = vmatpush1.msra.mxu0 %v76
    %97 = vmatprep.subr.mxu0 0.0
    %98 = vmatpush1.msra.mxu0 %v75
    %99 = vmatprep.subr.mxu0 0.0
    %100 = vmatpush1.msra.mxu0 %v74
    %101 = vmatprep.subr.mxu0 0.0
    %102 = vmatpush1.msra.mxu0 %v73
    %103 = vmatprep.subr.mxu0 0.0
    %104 = vmatpush1.msra.mxu0 %v72
    %105 = vmatprep.subr.mxu0 0.0
    %106 = vmatpush1.msra.mxu0 %v71
    %107 = vmatprep.subr.mxu0 0.0
    %108 = vmatpush1.msra.mxu0 %v70
    %109 = vmatprep.subr.mxu0 0.0
    %110 = vmatpush1.msra.mxu0 %v69
    %111 = vmatprep.subr.mxu0 0.0
    %112 = vmatpush1.msra.mxu0 %v68
    %113 = vmatprep.subr.mxu0 0.0
    %114 = vmatpush1.msra.mxu0 %v67
    %115 = vmatprep.subr.mxu0 0.0
    %116 = vmatpush2.msra.mxu0 0.0
    %117 = vmatprep.subr.mxu0 0.0
    %118 = vmatpush2.msra.mxu0 0.0
    %119 = vmatprep.subr.mxu0 0.0
    %120 = vmatpush2.msra.mxu0 0.0
    %121 = vmatprep.subr.mxu0 0.0
    %122 = vmatpush2.msra.mxu0 0.0
    %123 = vmatprep.subr.mxu0 0.0
    %124 = vmatpush2.msra.mxu0 0.0
    %125 = vmatprep.subr.mxu0 0.0
    %126 = vmatpush2.msra.mxu0 0.0
    %127 = vmatprep.subr.mxu0 0.0
    %128 = vmatpush2.msra.mxu0 0.0
    %129 = vmatprep.subr.mxu0 0.0
    %130 = vmatpush2.msra.mxu0 0.0
    %131 = vmatprep.subr.mxu0 0.0
    %132 = vmatpush2.msra.mxu0 0.0
    %133 = vmatprep.subr.mxu0 0.0
    %134 = vmatpush2.msra.mxu0 0.0
    %135 = vmatprep.subr.mxu0 0.0
    %136 = vmatpush2.msra.mxu0 0.0
    %137 = vmatprep.subr.mxu0 0.0
    %138 = vmatpush2.msra.mxu0 0.0
    %139 = vmatprep.subr.mxu0 0.0
    %140 = vmatpush2.msra.mxu0 0.0
    %141 = vmatprep.subr.mxu0 0.0
    %142 = vmatpush2.msra.mxu0 0.0
    %143 = vmatprep.subr.mxu0 0.0
    %144 = vmatpush2.msra.mxu0 0.0
    %145 = vmatprep.subr.mxu0 0.0
    %146 = vmatpush2.msra.mxu0 0.0
    %147 = vmatprep.mubr.f32.mxu0 0.0
    %148 = vmatmul.mubr.f32.gmra.mxu0 %v66
    %v149 = vpop.f32.mrf.mxu0
    %v150 = vadd.f32 0.0, %v149
    %v151 = vpop.f32.mrf.mxu0
    %152 = vdwg.mxu0
    %v153 = vld [vmem:[%s3] sm:$0x1]
    %v155 = vlaneseq
    %v156 = vshrl.u32 %v155, 7
    %v157 = vsub.s32 0, %v156
    %v158 = vrot.slane %v153, %v157
    %v160 = vsel %vm64, %v158, 0.0
    %161 = vadd.xlane.f32.xlu0 %v160
    %v162 = vpop.xlane.xlu0 %161
    %v163 = vld [vmem:[%s50] sm:$0xff]
    %v164 = vsub.f32 %v163, %v150
    %v165 = vmul.f32 %v164, %v164
    %vm166 = vcmask 261120
    %v167 = vsel %vm166, %v165, 0.0
    %168 = vadd.xlane.f32.xlu0 %v167
    %v169 = vpop.xlane.xlu0 %168
    %v170 = vrsqrt.pop %v169
    %v171 = vmul.f32 %v169, %v170
    %vm172 = vcmp.eq.f32.partialorder %v169, inf
    %v173 = vsel %vm172, %v169, %v171
    %vm174 = vcmp.eq.f32.partialorder %v169, 0.0
    %v175 = vand.u32 %v169, 2147483648
    %v176 = vsel %vm174, %v175, %v173
    %v177 = vld [vmem:[#allocation2] sm:$0x1]
    %v178 = vsub.f32 %v176, %v162
    %v179 = vand.u32 2147483647, %v178
    %v180 = vrot.slane %v179, 4
    %v181 = vadd.f32 %v179, %v180
    %v182 = vrot.slane %v181, 2
    %v183 = vadd.f32 %v181, %v182
    %v184 = vrot.slane %v183, 1
    %v185 = vadd.f32 %v183, %v184
    %v186 = vadd.f32 %v177, %v185
    %vm187 = vcmask 0
    %188 = vst.msk [vmem:[#allocation2] sm:$0x1] %vm187, %v186
    // Predicated region
    $region22: #{tpu_custom_call.1} parent=1 // pred_check
      %p189 = pneg %p52
    $region23: #{tpu_custom_call.1} parent=1 // pred_check_branch
      %191 = sbr.rel (%p189) target = $region25
    $region24: #{tpu_custom_call.1} parent=1 // pred_region
      %v192 = vld [vmem:[#allocation2] sm:$0x1]
      %v193 = vmul.f32 %v192, 0.125
      %194 = vst.msk [vmem:[#allocation3] sm:$0x1] %vm187, %v193
    $region25: #{tpu_custom_call.1} parent=1 // pred_fallthru
      _
    // Predicated region
    $region26: #{tpu_custom_call.1} parent=1 // pred_check
      _
    $region27: #{tpu_custom_call.1} parent=1 // pred_check_branch
      %196 = sbr.rel (0) target = $region29
    $region28: #{tpu_custom_call.1} parent=1 // pred_region
      %s198 = ssub.s32 16, 16
      %199 = vsyncadd [#allocation4], %s198
      %s201 = sshll.u32 [#allocation3], 4
      %s202 = int_to_ptr.vmem [resolvable:$true] %s201
      %204 = dma.vmem_to_hbm [thread:$0]  %s202, 16, %s4, [#allocation4]
    $region29: #{tpu_custom_call.1} parent=1 // pred_fallthru
      _
    // Predicated region
    $region30: #{tpu_custom_call.1} parent=1 // pred_check
      _
    $region31: #{tpu_custom_call.1} parent=1 // pred_check_branch
      %206 = sbr.rel (0) target = $region33
    $region32: #{tpu_custom_call.1} parent=1 // pred_region
      %207 = dma.done [#allocation4], 16
    $region33: #{tpu_custom_call.1} parent=1 // pred_fallthru
      _
    %208 = vsyncpa [#allocation4], 1

// kernel: tpu_custom_call.1
$region0: #{tpu_custom_call.1}
  #allocation0 [shape = 'u32[]', space=smem, size = 0x4, offset = 0x4, fixed_abs, tag = 'smem constant byte address 0x4 - core index']
  #allocation1 [shape = 'u32[144,128]{1,0:T(1,128)}', space=vmem, size = 0x12000, scoped, tag = 'internal scratch']
  #allocation2 [shape = 'f32[1,1]{1,0:T(1,128)}', space=vmem, size = 0x200, scoped, tag = 'scratch operand']
  %s0 = inlined_call_operand.vmem [shape: s32[8,1], index: 0, kind: input, shape index: {}]
  %s1 = inlined_call_operand.vmem [shape: f32[8,32], index: 1, kind: input, shape index: {}]
  %s2 = inlined_call_operand.vmem [shape: f32[128,32], index: 2, kind: input, shape index: {}]
  %s3 = inlined_call_operand.vmem [shape: f32[1,128], index: 3, kind: input, shape index: {}]
  %s4 = inlined_call_operand.hbm [shape: f32[1,1,1], index: 4, kind: output, shape index: {}]
  %s5 = sld [smem:[#allocation0]]
  $region34: #{tpu_custom_call.1} parent=0
    _
  %s7 = ssub.s32 1, %s5
  %s8 = scalar_select 0, %s7, %s5
  $region1: #{tpu_custom_call.1} parent=0
    #allocation3 [shape = 'u8[512]{0}', space=vmem, size = 0x400, scoped, tag = 'output window, operand 0, single buffered']
    #allocation4 [shape = 's32[1]{0}', space=sflag, size = 0x4, scoped, tag = 'scoped memory for tpu_custom_call.1']
    %9 = vsyncpa [#allocation4], 0
    // Predicated region
    $region2: #{tpu_custom_call.1} parent=1 // pred_check
      _
    $region3: #{tpu_custom_call.1} parent=1 // pred_check_branch
      %11 = sbr.rel (0) target = $region5
    $region4: #{tpu_custom_call.1} parent=1 // pred_region
      %s12 = sadd.s32 0, 0
      %p13 = scmp.lt.s32.totalorder %s12, 0
      %s14 = scalar_select %p13, %s12, 0
      %s15 = smul.addr %s14, 8
      %s16 = scalar_lea.vmem %s0, %s15
      %s17 = sadd.s32 0, 0
    $region5: #{tpu_custom_call.1} parent=1 // pred_fallthru
      _
    // Predicated region
    $region6: #{tpu_custom_call.1} parent=1 // pred_check
      _
    $region7: #{tpu_custom_call.1} parent=1 // pred_check_branch
      %19 = sbr.rel (0) target = $region9
    $region8: #{tpu_custom_call.1} parent=1 // pred_region
      %s20 = sadd.s32 0, 0
      %p21 = scmp.lt.s32.totalorder %s20, 0
      %s22 = scalar_select %p21, %s20, 0
      %s23 = smul.addr %s22, 8
      %s24 = scalar_lea.vmem %s1, %s23
      %s25 = sadd.s32 0, 0
    $region9: #{tpu_custom_call.1} parent=1 // pred_fallthru
      _
    // Predicated region
    $region10: #{tpu_custom_call.1} parent=1 // pred_check
      _
    $region11: #{tpu_custom_call.1} parent=1 // pred_check_branch
      %27 = sbr.rel (0) target = $region13
    $region12: #{tpu_custom_call.1} parent=1 // pred_region
      _
    $region13: #{tpu_custom_call.1} parent=1 // pred_fallthru
      _
    // Predicated region
    $region14: #{tpu_custom_call.1} parent=1 // pred_check
      _
    $region15: #{tpu_custom_call.1} parent=1 // pred_check_branch
      %29 = sbr.rel (0) target = $region17
    $region16: #{tpu_custom_call.1} parent=1 // pred_region
      _
    $region17: #{tpu_custom_call.1} parent=1 // pred_fallthru
      _
    %s30 = sadd.s32 0, 0
    %p31 = scmp.lt.s32.totalorder %s30, 0
    %s32 = scalar_select %p31, %s30, 0
    %s33 = smul.addr %s32, 8
    %s34 = scalar_lea.vmem %s0, %s33
    %s35 = sadd.s32 0, 0
    %p36 = scmp.lt.s32.totalorder %s35, 0
    %s37 = scalar_select %p36, %s35, 0
    %s38 = smul.addr %s37, 8
    %s39 = scalar_lea.vmem %s1, %s38
    %s40 = sadd.s32 0, 0
    %p41 = scmp.lt.s32.totalorder %s40, 0
    %s42 = scalar_select %p41, %s40, 0
    %s43 = smul.addr %s42, 8
    %s44 = scalar_lea.vmem %s0, %s43
    %s45 = sadd.s32 0, 0
    %s46 = sadd.s32 0, 0
    %p47 = scmp.lt.s32.totalorder %s46, 0
    %s48 = scalar_select %p47, %s46, 0
    %s49 = smul.addr %s48, 8
    %s50 = scalar_lea.vmem %s1, %s49
    %s51 = sadd.s32 0, 0
    %p52 = scmp.eq.s32.totalorder 0, 0
    // Predicated region
    $region18: #{tpu_custom_call.1} parent=1 // pred_check
      %p53 = pneg %p52
    $region19: #{tpu_custom_call.1} parent=1 // pred_check_branch
      %55 = sbr.rel (%p53) target = $region21
    $region20: #{tpu_custom_call.1} parent=1 // pred_region
      %vm56 = vcmask 0
      %57 = vst.msk [vmem:[#allocation2] sm:$0x1] %vm56, 0.0
    $region21: #{tpu_custom_call.1} parent=1 // pred_fallthru
      _
    %v58 = vld [vmem:[%s44] sm:$0xff]
    %v59 = vlaneseq
    %v60 = vand.u32 %v59, 127
    %61 = vset.pattern.permute.xlu0 0
    %62 = vperm.xlu0 %61, %v58
    %v63 = vpop.permute.xlu0 %62
    %vm64 = vcmp.eq.s32.totalorder %v60, %v63
    %v65 = vsel %vm64, 1, 0
    %v66 = vcvt.s32.f32 %v65
    %v67 = vld [vmem:[%s2] sm:$0xff]
    %v68 = vld [vmem:[%s2 + $0x8] sm:$0xff]
    %v69 = vld [vmem:[%s2 + $0x10] sm:$0xff]
    %v70 = vld [vmem:[%s2 + $0x18] sm:$0xff]
    %v71 = vld [vmem:[%s2 + $0x20] sm:$0xff]
    %v72 = vld [vmem:[%s2 + $0x28] sm:$0xff]
    %v73 = vld [vmem:[%s2 + $0x30] sm:$0xff]
    %v74 = vld [vmem:[%s2 + $0x38] sm:$0xff]
    %v75 = vld [vmem:[%s2 + $0x40] sm:$0xff]
    %v76 = vld [vmem:[%s2 + $0x48] sm:$0xff]
    %v77 = vld [vmem:[%s2 + $0x50] sm:$0xff]
    %v78 = vld [vmem:[%s2 + $0x58] sm:$0xff]
    %v79 = vld [vmem:[%s2 + $0x60] sm:$0xff]
    %v80 = vld [vmem:[%s2 + $0x68] sm:$0xff]
    %v81 = vld [vmem:[%s2 + $0x70] sm:$0xff]
    %v82 = vld [vmem:[%s2 + $0x78] sm:$0xff]
    %83 = vmatprep.subr.mxu0 0.0
    %84 = vmatpush1.msra.mxu0 %v82
    %85 = vmatprep.subr.mxu0 0.0
    %86 = vmatpush1.msra.mxu0 %v81
    %87 = vmatprep.subr.mxu0 0.0
    %88 = vmatpush1.msra.mxu0 %v80
    %89 = vmatprep.subr.mxu0 0.0
    %90 = vmatpush1.msra.mxu0 %v79
    %91 = vmatprep.subr.mxu0 0.0
    %92 = vmatpush1.msra.mxu0 %v78
    %93 = vmatprep.subr.mxu0 0.0
    %94 = vmatpush1.msra.mxu0 %v77
    %95 = vmatprep.subr.mxu0 0.0
    %96 = vmatpush1.msra.mxu0 %v76
    %97 = vmatprep.subr.mxu0 0.0
    %98 = vmatpush1.msra.mxu0 %v75
    %99 = vmatprep.subr.mxu0 0.0
    %100 = vmatpush1.msra.mxu0 %v74
    %101 = vmatprep.subr.mxu0 0.0
    %102 = vmatpush1.msra.mxu0 %v73
    %103 = vmatprep.subr.mxu0 0.0
    %104 = vmatpush1.msra.mxu0 %v72
    %105 = vmatprep.subr.mxu0 0.0
    %106 = vmatpush1.msra.mxu0 %v71
    %107 = vmatprep.subr.mxu0 0.0
    %108 = vmatpush1.msra.mxu0 %v70
    %109 = vmatprep.subr.mxu0 0.0
    %110 = vmatpush1.msra.mxu0 %v69
    %111 = vmatprep.subr.mxu0 0.0
    %112 = vmatpush1.msra.mxu0 %v68
    %113 = vmatprep.subr.mxu0 0.0
    %114 = vmatpush1.msra.mxu0 %v67
    %115 = vmatprep.subr.mxu0 0.0
    %116 = vmatpush2.msra.mxu0 0.0
    %117 = vmatprep.subr.mxu0 0.0
    %118 = vmatpush2.msra.mxu0 0.0
    %119 = vmatprep.subr.mxu0 0.0
    %120 = vmatpush2.msra.mxu0 0.0
    %121 = vmatprep.subr.mxu0 0.0
    %122 = vmatpush2.msra.mxu0 0.0
    %123 = vmatprep.subr.mxu0 0.0
    %124 = vmatpush2.msra.mxu0 0.0
    %125 = vmatprep.subr.mxu0 0.0
    %126 = vmatpush2.msra.mxu0 0.0
    %127 = vmatprep.subr.mxu0 0.0
    %128 = vmatpush2.msra.mxu0 0.0
    %129 = vmatprep.subr.mxu0 0.0
    %130 = vmatpush2.msra.mxu0 0.0
    %131 = vmatprep.subr.mxu0 0.0
    %132 = vmatpush2.msra.mxu0 0.0
    %133 = vmatprep.subr.mxu0 0.0
    %134 = vmatpush2.msra.mxu0 0.0
    %135 = vmatprep.subr.mxu0 0.0
    %136 = vmatpush2.msra.mxu0 0.0
    %137 = vmatprep.subr.mxu0 0.0
    %138 = vmatpush2.msra.mxu0 0.0
    %139 = vmatprep.subr.mxu0 0.0
    %140 = vmatpush2.msra.mxu0 0.0
    %141 = vmatprep.subr.mxu0 0.0
    %142 = vmatpush2.msra.mxu0 0.0
    %143 = vmatprep.subr.mxu0 0.0
    %144 = vmatpush2.msra.mxu0 0.0
    %145 = vmatprep.subr.mxu0 0.0
    %146 = vmatpush2.msra.mxu0 0.0
    %147 = vmatprep.mubr.f32.mxu0 0.0
    %148 = vmatmul.mubr.f32.gmra.mxu0 %v66
    %v149 = vpop.f32.mrf.mxu0
    %v150 = vadd.f32 0.0, %v149
    %v151 = vpop.f32.mrf.mxu0
    %152 = vdwg.mxu0
    %v153 = vld [vmem:[%s3] sm:$0x1]
    %v155 = vlaneseq
    %v156 = vshrl.u32 %v155, 7
    %v157 = vsub.s32 0, %v156
    %v158 = vrot.slane %v153, %v157
    %v160 = vsel %vm64, %v158, 0.0
    %161 = vadd.xlane.f32.xlu0 %v160
    %v162 = vpop.xlane.xlu0 %161
    %v163 = vld [vmem:[%s50] sm:$0xff]
    %v164 = vsub.f32 %v163, %v150
    %v165 = vmul.f32 %v164, %v164
    %vm166 = vcmask 261120
    %v167 = vsel %vm166, %v165, 0.0
    %168 = vadd.xlane.f32.xlu0 %v167
    %v169 = vpop.xlane.xlu0 %168
    %v170 = vrsqrt.pop %v169
    %v171 = vmul.f32 %v169, %v170
    %vm172 = vcmp.eq.f32.partialorder %v169, inf
    %v173 = vsel %vm172, %v169, %v171
    %vm174 = vcmp.eq.f32.partialorder %v169, 0.0
    %v175 = vand.u32 %v169, 2147483648
    %v176 = vsel %vm174, %v175, %v173
    %v177 = vld [vmem:[#allocation2] sm:$0x1]
    %v178 = vsub.f32 %v176, %v162
    %v179 = vand.u32 2147483647, %v178
    %v180 = vrot.slane %v179, 4
    %v181 = vadd.f32 %v179, %v180
    %v182 = vrot.slane %v181, 2
    %v183 = vadd.f32 %v181, %v182
    %v184 = vrot.slane %v183, 1
    %v185 = vadd.f32 %v183, %v184
    %v186 = vadd.f32 %v177, %v185
    %vm187 = vcmask 0
    %188 = vst.msk [vmem:[#allocation2] sm:$0x1] %vm187, %v186
    // Predicated region
    $region22: #{tpu_custom_call.1} parent=1 // pred_check
      %p189 = pneg %p52
    $region23: #{tpu_custom_call.1} parent=1 // pred_check_branch
      %191 = sbr.rel (%p189) target = $region25
    $region24: #{tpu_custom_call.1} parent=1 // pred_region
      %v192 = vld [vmem:[#allocation2] sm:$0x1]
      %v193 = vmul.f32 %v192, 0.125
      %194 = vst.msk [vmem:[#allocation3] sm:$0x1] %vm187, %v193
    $region25: #{tpu_custom_call.1} parent=1 // pred_fallthru
      _
    // Predicated region
    $region26: #{tpu_custom_call.1} parent=1 // pred_check
      _
    $region27: #{tpu_custom_call.1} parent=1 // pred_check_branch
      %196 = sbr.rel (0) target = $region29
    $region28: #{tpu_custom_call.1} parent=1 // pred_region
      %s198 = ssub.s32 16, 16
      %199 = vsyncadd [#allocation4], %s198
      %s201 = sshll.u32 [#allocation3], 4
      %s202 = int_to_ptr.vmem [resolvable:$true] %s201
      %204 = dma.vmem_to_hbm [thread:$0]  %s202, 16, %s4, [#allocation4]
    $region29: #{tpu_custom_call.1} parent=1 // pred_fallthru
      _
    // Predicated region
    $region30: #{tpu_custom_call.1} parent=1 // pred_check
      _
    $region31: #{tpu_custom_call.1} parent=1 // pred_check_branch
      %206 = sbr.rel (0) target = $region33
    $region32: #{tpu_custom_call.1} parent=1 // pred_region
      %207 = dma.done [#allocation4], 16
    $region33: #{tpu_custom_call.1} parent=1 // pred_fallthru
      _
    %208 = vsyncpa [#allocation4], 1

</llo_original>
